<compile_context>
chip_gen: v6e
topology: v6e:2x2x1
jax: 0.10.0
libtpu: 0.0.40
codegen_flags: <defaults>
</compile_context>

<pallas_src>
import jax
import jax.numpy as jnp
from jax.experimental import pallas as pl
from jax.experimental.pallas import tpu as pltpu


def _mlp_kernel(xT_ref,
                w_in_ref, b_in_ref,
                w_h0_ref, b_h0_ref,
                w_h1_ref, b_h1_ref,
                w_h2_ref, b_h2_ref,
                w_out_ref, b_out_ref,
                o_ref):
    # xT_ref: [in_feats, tile_n] bf16, weights: [f_out, f_in] bf16,
    # biases: [f_out, 1] f32, o_ref: [out_feats, tile_n] f32.
    # Input layer (Linear only, no ReLU -- matches the torch module).
    h = jnp.dot(w_in_ref[...], xT_ref[...],
                preferred_element_type=jnp.float32) + b_in_ref[...]

    # 3 hidden layers: Linear + ReLU.  bf16 operands, f32 accumulation.
    for w_ref, b_ref in ((w_h0_ref, b_h0_ref),
                         (w_h1_ref, b_h1_ref),
                         (w_h2_ref, b_h2_ref)):
        h = jnp.dot(w_ref[...], h.astype(jnp.bfloat16),
                    preferred_element_type=jnp.float32) + b_ref[...]
        h = jnp.maximum(h, 0.0)

    # Output layer (Linear only, no ReLU).  Lane-dense store, no reshape.
    y = jnp.dot(w_out_ref[...], h.astype(jnp.bfloat16),
                preferred_element_type=jnp.float32) + b_out_ref[...]
    o_ref[...] = y.astype(o_ref.dtype)


def _pick_tile_n(n_pad, requested):
    """Pick the batch/lane tile: a multiple of 128 that divides n_pad.

    Preference order: (a) at least 2 grid steps when possible (v7x dual TC),
    (b) tile is a multiple of 256 (v6e/v7x MXU N width), (c) largest tile
    not exceeding `requested`.
    """
    requested = max(128, requested)
    k = n_pad // 128
    best_tile, best_score = 128, None
    for g in range(1, k + 1):
        if k % g:
            continue
        tile = g * 128
        if tile > requested:
            break
        steps = k // g
        score = (steps >= 2, tile % 256 == 0, tile)
        if best_score is None or score > best_score:
            best_tile, best_score = tile, score
    return best_tile


def feature_model_forward(x, params, *, max_tile_n=4096):
    """Run the 5-layer MLP with a Pallas kernel, tiled over the batch dim.

    x: [n, in_feats] f32.  params: torch-layout weights w_* [f_out, f_in]
    and biases b_* [f_out].  Returns [n, out_feats] f32.
    """
    n, in_feats = x.shape
    hid = params["w_in"].shape[0]
    out_feats = params["w_out"].shape[0]

    # Lane alignment only: pad the batch to a multiple of 128 (<= 127 rows).
    n_pad = 128 * pl.cdiv(n, 128)
    tile_n = _pick_tile_n(n_pad, max_tile_n)
    grid = (n_pad // tile_n,)

    # Feature-major bf16 input slab [in_feats, n_pad] (fused transpose+cast).
    xT = x.T.astype(jnp.bfloat16)
    if n_pad != n:
        xT = jnp.pad(xT, ((0, 0), (0, n_pad - n)))

    def wcast(w):
        return w.astype(jnp.bfloat16)

    def bcol(b):
        return b.reshape(-1, 1).astype(jnp.float32)

    # Weights/biases are tiny, fully VMEM-resident; constant index_map so the
    # pipeline fetches them once.
    def full(shape):
        return pl.BlockSpec(shape, lambda i: (0, 0))

    in_specs = [
        pl.BlockSpec((in_feats, tile_n), lambda i: (0, i)),   # xT tile
        full((hid, in_feats)), full((hid, 1)),                # input layer
        full((hid, hid)), full((hid, 1)),                     # hidden 0
        full((hid, hid)), full((hid, 1)),                     # hidden 1
        full((hid, hid)), full((hid, 1)),                     # hidden 2
        full((out_feats, hid)), full((out_feats, 1)),         # output layer
    ]
    out_spec = pl.BlockSpec((out_feats, tile_n), lambda i: (0, i))

    yT = pl.pallas_call(
        _mlp_kernel,
        out_shape=jax.ShapeDtypeStruct((out_feats, n_pad), jnp.float32),
        grid_spec=pltpu.PrefetchScalarGridSpec(
            num_scalar_prefetch=0,
            grid=grid,
            in_specs=in_specs,
            out_specs=out_spec,
        ),
        compiler_params=pltpu.CompilerParams(
            dimension_semantics=("parallel",)),
    )(xT,
      wcast(params["w_in"]), bcol(params["b_in"]),
      wcast(params["w_h0"]), bcol(params["b_h0"]),
      wcast(params["w_h1"]), bcol(params["b_h1"]),
      wcast(params["w_h2"]), bcol(params["b_h2"]),
      wcast(params["w_out"]), bcol(params["b_out"]))

    # Back to caller layout [n, out_feats]; output is tiny (n * 8 values).
    out = yT.T
    if n_pad != n:
        out = out[:n]
    return out


def init_params(key, in_feats, hid_feats, out_feats):
    """Deterministic synthetic init, torch layout: W [f_out, f_in], b [f_out]."""
    def linear(key, f_in, f_out):
        kw, kb = jax.random.split(key)
        bound = 1.0 / jnp.sqrt(f_in)
        w = jax.random.uniform(kw, (f_out, f_in), jnp.float32, -bound, bound)
        b = jax.random.uniform(kb, (f_out,), jnp.float32, -bound, bound)
        return w, b

    ks = jax.random.split(key, 5)
    w_in, b_in = linear(ks[0], in_feats, hid_feats)
    w_h0, b_h0 = linear(ks[1], hid_feats, hid_feats)
    w_h1, b_h1 = linear(ks[2], hid_feats, hid_feats)
    w_h2, b_h2 = linear(ks[3], hid_feats, hid_feats)
    w_out, b_out = linear(ks[4], hid_feats, out_feats)
    return dict(w_in=w_in, b_in=b_in,
                w_h0=w_h0, b_h0=b_h0,
                w_h1=w_h1, b_h1=b_h1,
                w_h2=w_h2, b_h2=b_h2,
                w_out=w_out, b_out=b_out)


def reference_forward_bf16(x, p):
    """Pure-JAX reference with the same bf16-operand / f32-accumulate math."""
    def lin(h, w, b):
        return jnp.dot(h.astype(jnp.bfloat16), w.astype(jnp.bfloat16).T,
                       preferred_element_type=jnp.float32) + b
    h = lin(x, p["w_in"], p["b_in"])
    for name in ("h0", "h1", "h2"):
        h = jnp.maximum(lin(h, p["w_" + name], p["b_" + name]), 0.0)
    return lin(h, p["w_out"], p["b_out"])


if __name__ == "__main__":
    key = jax.random.PRNGKey(0)
    k_x, k_p, k_x2 = jax.random.split(key, 3)

    # Small shapes consistent with a chemical-feature MLP.
    batch, in_feats, hid_feats, out_feats = 128, 16, 32, 8
    x = jax.random.normal(k_x, (batch, in_feats), jnp.float32)
    params = init_params(k_p, in_feats, hid_feats, out_feats)

    # batch=128 -> tile 128, single grid step, no padding at all.
    out = jax.block_until_ready(feature_model_forward(x, params))
    ref = reference_forward_bf16(x, params)
    assert out.shape == (batch, out_feats)
    assert jnp.allclose(out, ref, atol=1e-2, rtol=1e-2)

    # Multi-tile path: batch=512 -> tile 256, 2 grid steps (both TCs on v7x).
    x2 = jax.random.normal(k_x2, (512, in_feats), jnp.float32)
    out2 = jax.block_until_ready(feature_model_forward(x2, params))
    ref2 = reference_forward_bf16(x2, params)
    assert out2.shape == (512, out_feats)
    assert jnp.allclose(out2, ref2, atol=1e-2, rtol=1e-2)

    print("KERNEL_OK")
</pallas_src>

<mosaic_0001>
module attributes {stable_mosaic.version = 11 : i64} {
  func.func @_mlp_kernel(%arg0: i32, %arg1: memref<16x128xbf16, #tpu.memory_space<vmem>>, %arg2: memref<32x16xbf16, #tpu.memory_space<vmem>>, %arg3: memref<32x1xf32, #tpu.memory_space<vmem>>, %arg4: memref<32x32xbf16, #tpu.memory_space<vmem>>, %arg5: memref<32x1xf32, #tpu.memory_space<vmem>>, %arg6: memref<32x32xbf16, #tpu.memory_space<vmem>>, %arg7: memref<32x1xf32, #tpu.memory_space<vmem>>, %arg8: memref<32x32xbf16, #tpu.memory_space<vmem>>, %arg9: memref<32x1xf32, #tpu.memory_space<vmem>>, %arg10: memref<8x32xbf16, #tpu.memory_space<vmem>>, %arg11: memref<8x1xf32, #tpu.memory_space<vmem>>, %arg12: memref<8x128xf32, #tpu.memory_space<vmem>>) attributes {dimension_semantics = [#tpu.dimension_semantics<parallel>], iteration_bounds = array<i64: 1>, scalar_prefetch = 0 : i64, scratch_operands = 0 : i64, tpu.core_type = #tpu.core_type<tc>, window_params = [{transform_indices = @transform_0, window_bounds = array<i64: 16, 128>}, {pipeline_mode = #tpu.pipeline_mode<synchronous>, transform_indices = @transform_1, window_bounds = array<i64: 32, 16>}, {pipeline_mode = #tpu.pipeline_mode<synchronous>, transform_indices = @transform_2, window_bounds = array<i64: 32, 1>}, {pipeline_mode = #tpu.pipeline_mode<synchronous>, transform_indices = @transform_3, window_bounds = array<i64: 32, 32>}, {pipeline_mode = #tpu.pipeline_mode<synchronous>, transform_indices = @transform_4, window_bounds = array<i64: 32, 1>}, {pipeline_mode = #tpu.pipeline_mode<synchronous>, transform_indices = @transform_5, window_bounds = array<i64: 32, 32>}, {pipeline_mode = #tpu.pipeline_mode<synchronous>, transform_indices = @transform_6, window_bounds = array<i64: 32, 1>}, {pipeline_mode = #tpu.pipeline_mode<synchronous>, transform_indices = @transform_7, window_bounds = array<i64: 32, 32>}, {pipeline_mode = #tpu.pipeline_mode<synchronous>, transform_indices = @transform_8, window_bounds = array<i64: 32, 1>}, {pipeline_mode = #tpu.pipeline_mode<synchronous>, transform_indices = @transform_9, window_bounds = array<i64: 8, 32>}, {pipeline_mode = #tpu.pipeline_mode<synchronous>, transform_indices = @transform_10, window_bounds = array<i64: 8, 1>}, {transform_indices = @transform_11, window_bounds = array<i64: 8, 128>}]} {
    %c0 = arith.constant 0 : index
    %c0_0 = arith.constant 0 : index
    %0 = vector.load %arg2[%c0, %c0_0] : memref<32x16xbf16, #tpu.memory_space<vmem>>, vector<32x16xbf16>
    %c0_1 = arith.constant 0 : index
    %c0_2 = arith.constant 0 : index
    %1 = vector.load %arg1[%c0_1, %c0_2] : memref<16x128xbf16, #tpu.memory_space<vmem>>, vector<16x128xbf16>
    %cst = arith.constant dense<0.000000e+00> : vector<32x128xf32>
    %2 = tpu.matmul %0, %1, %cst {dimension_numbers = #tpu.dot_dimension_numbers<[1], [0], [0], [1], [0, 0, 1, 1], [], []>} : vector<32x16xbf16>, vector<16x128xbf16>, vector<32x128xf32> -> vector<32x128xf32>
    %c0_3 = arith.constant 0 : index
    %c0_4 = arith.constant 0 : index
    %3 = vector.load %arg3[%c0_3, %c0_4] : memref<32x1xf32, #tpu.memory_space<vmem>>, vector<32x1xf32>
    %4 = vector.broadcast %3 : vector<32x1xf32> to vector<32x128xf32>
    %5 = arith.addf %2, %4 : vector<32x128xf32>
    %c0_5 = arith.constant 0 : index
    %c0_6 = arith.constant 0 : index
    %6 = vector.load %arg4[%c0_5, %c0_6] : memref<32x32xbf16, #tpu.memory_space<vmem>>, vector<32x32xbf16>
    %7 = arith.truncf %5 : vector<32x128xf32> to vector<32x128xbf16>
    %cst_7 = arith.constant dense<0.000000e+00> : vector<32x128xf32>
    %8 = tpu.matmul %6, %7, %cst_7 {dimension_numbers = #tpu.dot_dimension_numbers<[1], [0], [0], [1], [0, 0, 1, 1], [], []>} : vector<32x32xbf16>, vector<32x128xbf16>, vector<32x128xf32> -> vector<32x128xf32>
    %c0_8 = arith.constant 0 : index
    %c0_9 = arith.constant 0 : index
    %9 = vector.load %arg5[%c0_8, %c0_9] : memref<32x1xf32, #tpu.memory_space<vmem>>, vector<32x1xf32>
    %10 = vector.broadcast %9 : vector<32x1xf32> to vector<32x128xf32>
    %11 = arith.addf %8, %10 : vector<32x128xf32>
    %cst_10 = arith.constant 0.000000e+00 : f32
    %12 = vector.broadcast %cst_10 : f32 to vector<32x128xf32>
    %13 = arith.maximumf %11, %12 : vector<32x128xf32>
    %c0_11 = arith.constant 0 : index
    %c0_12 = arith.constant 0 : index
    %14 = vector.load %arg6[%c0_11, %c0_12] : memref<32x32xbf16, #tpu.memory_space<vmem>>, vector<32x32xbf16>
    %15 = arith.truncf %13 : vector<32x128xf32> to vector<32x128xbf16>
    %cst_13 = arith.constant dense<0.000000e+00> : vector<32x128xf32>
    %16 = tpu.matmul %14, %15, %cst_13 {dimension_numbers = #tpu.dot_dimension_numbers<[1], [0], [0], [1], [0, 0, 1, 1], [], []>} : vector<32x32xbf16>, vector<32x128xbf16>, vector<32x128xf32> -> vector<32x128xf32>
    %c0_14 = arith.constant 0 : index
    %c0_15 = arith.constant 0 : index
    %17 = vector.load %arg7[%c0_14, %c0_15] : memref<32x1xf32, #tpu.memory_space<vmem>>, vector<32x1xf32>
    %18 = vector.broadcast %17 : vector<32x1xf32> to vector<32x128xf32>
    %19 = arith.addf %16, %18 : vector<32x128xf32>
    %cst_16 = arith.constant 0.000000e+00 : f32
    %20 = vector.broadcast %cst_16 : f32 to vector<32x128xf32>
    %21 = arith.maximumf %19, %20 : vector<32x128xf32>
    %c0_17 = arith.constant 0 : index
    %c0_18 = arith.constant 0 : index
    %22 = vector.load %arg8[%c0_17, %c0_18] : memref<32x32xbf16, #tpu.memory_space<vmem>>, vector<32x32xbf16>
    %23 = arith.truncf %21 : vector<32x128xf32> to vector<32x128xbf16>
    %cst_19 = arith.constant dense<0.000000e+00> : vector<32x128xf32>
    %24 = tpu.matmul %22, %23, %cst_19 {dimension_numbers = #tpu.dot_dimension_numbers<[1], [0], [0], [1], [0, 0, 1, 1], [], []>} : vector<32x32xbf16>, vector<32x128xbf16>, vector<32x128xf32> -> vector<32x128xf32>
    %c0_20 = arith.constant 0 : index
    %c0_21 = arith.constant 0 : index
    %25 = vector.load %arg9[%c0_20, %c0_21] : memref<32x1xf32, #tpu.memory_space<vmem>>, vector<32x1xf32>
    %26 = vector.broadcast %25 : vector<32x1xf32> to vector<32x128xf32>
    %27 = arith.addf %24, %26 : vector<32x128xf32>
    %cst_22 = arith.constant 0.000000e+00 : f32
    %28 = vector.broadcast %cst_22 : f32 to vector<32x128xf32>
    %29 = arith.maximumf %27, %28 : vector<32x128xf32>
    %c0_23 = arith.constant 0 : index
    %c0_24 = arith.constant 0 : index
    %30 = vector.load %arg10[%c0_23, %c0_24] : memref<8x32xbf16, #tpu.memory_space<vmem>>, vector<8x32xbf16>
    %31 = arith.truncf %29 : vector<32x128xf32> to vector<32x128xbf16>
    %cst_25 = arith.constant dense<0.000000e+00> : vector<8x128xf32>
    %32 = tpu.matmul %30, %31, %cst_25 {dimension_numbers = #tpu.dot_dimension_numbers<[1], [0], [0], [1], [0, 0, 1, 1], [], []>} : vector<8x32xbf16>, vector<32x128xbf16>, vector<8x128xf32> -> vector<8x128xf32>
    %c0_26 = arith.constant 0 : index
    %c0_27 = arith.constant 0 : index
    %33 = vector.load %arg11[%c0_26, %c0_27] : memref<8x1xf32, #tpu.memory_space<vmem>>, vector<8x1xf32>
    %34 = vector.broadcast %33 : vector<8x1xf32> to vector<8x128xf32>
    %35 = arith.addf %32, %34 : vector<8x128xf32>
    %c0_28 = arith.constant 0 : index
    %c0_29 = arith.constant 0 : index
    %36 = vector.load %arg12[%c0_28, %c0_29] : memref<8x128xf32, #tpu.memory_space<vmem>>, vector<8x128xf32>
    tpu.vector_store %arg12[%c0_28, %c0_29], %35 {strides = array<i32>} : memref<8x128xf32, #tpu.memory_space<vmem>>, vector<8x128xf32>,
    return
  }
  func.func @transform_0(%arg0: i32) -> (i32, i32) {
    %c0_i32 = arith.constant 0 : i32
    %c0_i32_0 = arith.constant 0 : i32
    return %c0_i32, %arg0 : i32, i32
  }
  func.func @transform_1(%arg0: i32) -> (i32, i32) {
    %c0_i32 = arith.constant 0 : i32
    %c0_i32_0 = arith.constant 0 : i32
    %c0_i32_1 = arith.constant 0 : i32
    return %c0_i32, %c0_i32_0 : i32, i32
  }
  func.func @transform_2(%arg0: i32) -> (i32, i32) {
    %c0_i32 = arith.constant 0 : i32
    %c0_i32_0 = arith.constant 0 : i32
    %c0_i32_1 = arith.constant 0 : i32
    return %c0_i32, %c0_i32_0 : i32, i32
  }
  func.func @transform_3(%arg0: i32) -> (i32, i32) {
    %c0_i32 = arith.constant 0 : i32
    %c0_i32_0 = arith.constant 0 : i32
    %c0_i32_1 = arith.constant 0 : i32
    return %c0_i32, %c0_i32_0 : i32, i32
  }
  func.func @transform_4(%arg0: i32) -> (i32, i32) {
    %c0_i32 = arith.constant 0 : i32
    %c0_i32_0 = arith.constant 0 : i32
    %c0_i32_1 = arith.constant 0 : i32
    return %c0_i32, %c0_i32_0 : i32, i32
  }
  func.func @transform_5(%arg0: i32) -> (i32, i32) {
    %c0_i32 = arith.constant 0 : i32
    %c0_i32_0 = arith.constant 0 : i32
    %c0_i32_1 = arith.constant 0 : i32
    return %c0_i32, %c0_i32_0 : i32, i32
  }
  func.func @transform_6(%arg0: i32) -> (i32, i32) {
    %c0_i32 = arith.constant 0 : i32
    %c0_i32_0 = arith.constant 0 : i32
    %c0_i32_1 = arith.constant 0 : i32
    return %c0_i32, %c0_i32_0 : i32, i32
  }
  func.func @transform_7(%arg0: i32) -> (i32, i32) {
    %c0_i32 = arith.constant 0 : i32
    %c0_i32_0 = arith.constant 0 : i32
    %c0_i32_1 = arith.constant 0 : i32
    return %c0_i32, %c0_i32_0 : i32, i32
  }
  func.func @transform_8(%arg0: i32) -> (i32, i32) {
    %c0_i32 = arith.constant 0 : i32
    %c0_i32_0 = arith.constant 0 : i32
    %c0_i32_1 = arith.constant 0 : i32
    return %c0_i32, %c0_i32_0 : i32, i32
  }
  func.func @transform_9(%arg0: i32) -> (i32, i32) {
    %c0_i32 = arith.constant 0 : i32
    %c0_i32_0 = arith.constant 0 : i32
    %c0_i32_1 = arith.constant 0 : i32
    return %c0_i32, %c0_i32_0 : i32, i32
  }
  func.func @transform_10(%arg0: i32) -> (i32, i32) {
    %c0_i32 = arith.constant 0 : i32
    %c0_i32_0 = arith.constant 0 : i32
    %c0_i32_1 = arith.constant 0 : i32
    return %c0_i32, %c0_i32_0 : i32, i32
  }
  func.func @transform_11(%arg0: i32) -> (i32, i32) {
    %c0_i32 = arith.constant 0 : i32
    %c0_i32_0 = arith.constant 0 : i32
    return %c0_i32, %arg0 : i32, i32
  }
}

</mosaic_0001>

<llo_original>
// kernel: tpu_custom_call.1
$region0: #{tpu_custom_call.1}
  #allocation0 [shape = 'u32[]', space=smem, size = 0x4, offset = 0x4, fixed_abs, tag = 'smem constant byte address 0x4 - core index']
  #allocation1 [shape = 'u32[144,128]{1,0:T(1,128)}', space=vmem, size = 0x12000, scoped, tag = 'internal scratch']
  %s0 = inlined_call_operand.vmem [shape: bf16[16,128], index: 0, kind: input, shape index: {}]
  %s1 = inlined_call_operand.vmem [shape: bf16[32,16], index: 1, kind: input, shape index: {}]
  %s2 = inlined_call_operand.vmem [shape: f32[32,1], index: 2, kind: input, shape index: {}]
  %s3 = inlined_call_operand.vmem [shape: bf16[32,32], index: 3, kind: input, shape index: {}]
  %s4 = inlined_call_operand.vmem [shape: f32[32,1], index: 4, kind: input, shape index: {}]
  %s5 = inlined_call_operand.vmem [shape: bf16[32,32], index: 5, kind: input, shape index: {}]
  %s6 = inlined_call_operand.vmem [shape: f32[32,1], index: 6, kind: input, shape index: {}]
  %s7 = inlined_call_operand.vmem [shape: bf16[32,32], index: 7, kind: input, shape index: {}]
  %s8 = inlined_call_operand.vmem [shape: f32[32,1], index: 8, kind: input, shape index: {}]
  %s9 = inlined_call_operand.vmem [shape: bf16[8,32], index: 9, kind: input, shape index: {}]
  %s10 = inlined_call_operand.vmem [shape: f32[8,1], index: 10, kind: input, shape index: {}]
  %s11 = inlined_call_operand.hbm [shape: f32[8,128], index: 11, kind: output, shape index: {}]
  %s12 = sld [smem:[#allocation0]]
  $region54: #{tpu_custom_call.1} parent=0
    _
  %s14 = ssub.s32 1, %s12
  %s15 = scalar_select 0, %s14, %s12
  $region1: #{tpu_custom_call.1} parent=0
    #allocation2 [shape = 'u8[4096]{0}', space=vmem, size = 0x1000, scoped, tag = 'output window, operand 0, single buffered']
    #allocation3 [shape = 's32[1]{0}', space=sflag, size = 0x4, scoped, tag = 'scoped memory for tpu_custom_call.1']
    %16 = vsyncpa [#allocation3], 0
    // Predicated region
    $region2: #{tpu_custom_call.1} parent=1 // pred_check
      _
    $region3: #{tpu_custom_call.1} parent=1 // pred_check_branch
      %18 = sbr.rel (0) target = $region5
    $region4: #{tpu_custom_call.1} parent=1 // pred_region
      _
    $region5: #{tpu_custom_call.1} parent=1 // pred_fallthru
      _
    // Predicated region
    $region6: #{tpu_custom_call.1} parent=1 // pred_check
      _
    $region7: #{tpu_custom_call.1} parent=1 // pred_check_branch
      %20 = sbr.rel (0) target = $region9
    $region8: #{tpu_custom_call.1} parent=1 // pred_region
      _
    $region9: #{tpu_custom_call.1} parent=1 // pred_fallthru
      _
    // Predicated region
    $region10: #{tpu_custom_call.1} parent=1 // pred_check
      _
    $region11: #{tpu_custom_call.1} parent=1 // pred_check_branch
      %22 = sbr.rel (0) target = $region13
    $region12: #{tpu_custom_call.1} parent=1 // pred_region
      _
    $region13: #{tpu_custom_call.1} parent=1 // pred_fallthru
      _
    // Predicated region
    $region14: #{tpu_custom_call.1} parent=1 // pred_check
      _
    $region15: #{tpu_custom_call.1} parent=1 // pred_check_branch
      %24 = sbr.rel (0) target = $region17
    $region16: #{tpu_custom_call.1} parent=1 // pred_region
      _
    $region17: #{tpu_custom_call.1} parent=1 // pred_fallthru
      _
    // Predicated region
    $region18: #{tpu_custom_call.1} parent=1 // pred_check
      _
    $region19: #{tpu_custom_call.1} parent=1 // pred_check_branch
      %26 = sbr.rel (0) target = $region21
    $region20: #{tpu_custom_call.1} parent=1 // pred_region
      _
    $region21: #{tpu_custom_call.1} parent=1 // pred_fallthru
      _
    // Predicated region
    $region22: #{tpu_custom_call.1} parent=1 // pred_check
      _
    $region23: #{tpu_custom_call.1} parent=1 // pred_check_branch
      %28 = sbr.rel (0) target = $region25
    $region24: #{tpu_custom_call.1} parent=1 // pred_region
      _
    $region25: #{tpu_custom_call.1} parent=1 // pred_fallthru
      _
    // Predicated region
    $region26: #{tpu_custom_call.1} parent=1 // pred_check
      _
    $region27: #{tpu_custom_call.1} parent=1 // pred_check_branch
      %30 = sbr.rel (0) target = $region29
    $region28: #{tpu_custom_call.1} parent=1 // pred_region
      _
    $region29: #{tpu_custom_call.1} parent=1 // pred_fallthru
      _
    // Predicated region
    $region30: #{tpu_custom_call.1} parent=1 // pred_check
      _
    $region31: #{tpu_custom_call.1} parent=1 // pred_check_branch
      %32 = sbr.rel (0) target = $region33
    $region32: #{tpu_custom_call.1} parent=1 // pred_region
      _
    $region33: #{tpu_custom_call.1} parent=1 // pred_fallthru
      _
    // Predicated region
    $region34: #{tpu_custom_call.1} parent=1 // pred_check
      _
    $region35: #{tpu_custom_call.1} parent=1 // pred_check_branch
      %34 = sbr.rel (0) target = $region37
    $region36: #{tpu_custom_call.1} parent=1 // pred_region
      _
    $region37: #{tpu_custom_call.1} parent=1 // pred_fallthru
      _
    // Predicated region
    $region38: #{tpu_custom_call.1} parent=1 // pred_check
      _
    $region39: #{tpu_custom_call.1} parent=1 // pred_check_branch
      %36 = sbr.rel (0) target = $region41
    $region40: #{tpu_custom_call.1} parent=1 // pred_region
      _
    $region41: #{tpu_custom_call.1} parent=1 // pred_fallthru
      _
    // Predicated region
    $region42: #{tpu_custom_call.1} parent=1 // pred_check
      _
    $region43: #{tpu_custom_call.1} parent=1 // pred_check_branch
      %38 = sbr.rel (0) target = $region45
    $region44: #{tpu_custom_call.1} parent=1 // pred_region
      _
    $region45: #{tpu_custom_call.1} parent=1 // pred_fallthru
      _
    %v40 = vld [vmem:[%s1] sm:$0xf]
    %v41 = vld [vmem:[%s1 + $0x4] sm:$0xf]
    %v42 = vld [vmem:[%s1 + $0x8] sm:$0xf]
    %v43 = vld [vmem:[%s1 + $0xc] sm:$0xf]
    %v44 = vld [vmem:[%s0] sm:$0xf]
    %v45 = vld [vmem:[%s0 + $0x4] sm:$0xf]
    %v46 = vld [vmem:[%s2] sm:$0xff]
    %v47 = vld [vmem:[%s2 + $0x8] sm:$0xff]
    %v48 = vld [vmem:[%s2 + $0x10] sm:$0xff]
    %v49 = vld [vmem:[%s2 + $0x18] sm:$0xff]
    %51 = vset.pattern.permute.xlu0 0
    %52 = vperm.xlu0 %51, %v46
    %v53 = vpop.permute.xlu0 %52
    %56 = vset.pattern.permute.xlu0 0
    %57 = vperm.xlu0 %56, %v47
    %v58 = vpop.permute.xlu0 %57
    %61 = vset.pattern.permute.xlu0 0
    %62 = vperm.xlu0 %61, %v48
    %v63 = vpop.permute.xlu0 %62
    %66 = vset.pattern.permute.xlu0 0
    %67 = vperm.xlu0 %66, %v49
    %v68 = vpop.permute.xlu0 %67
    %v74 = vunpack.c.l.b16 %v40
    %v75 = vunpack.c.l.b16 %v41
    %v76 = vunpack.c.l.b16 %v42
    %v77 = vunpack.c.l.b16 %v43
    %v78 = vpack.c.b16 %v75, %v74
    %v79 = vpack.c.b16 %v77, %v76
    %v82 = vunpack.c.l.b16 %v44
    %v83 = vunpack.c.l.b16 %v45
    %v84 = vpack.c.b16 %v83, %v82
    %vm86 = vcmask 130048
    %v88 = vsel %vm86, %v78, 0
    %v91 = vsel %vm86, %v79, 0
    %93 = vmatprep.subr.bf16.mxu0 0
    %94 = vmatpush1.bf16.msra.mxu0 0
    %95 = vmatprep.subr.bf16.mxu0 0
    %96 = vmatpush1.bf16.msra.mxu0 0
    %97 = vmatprep.subr.bf16.mxu0 0
    %98 = vmatpush1.bf16.msra.mxu0 0
    %99 = vmatprep.subr.bf16.mxu0 0
    %100 = vmatpush1.bf16.msra.mxu0 0
    %101 = vmatprep.subr.bf16.mxu0 0
    %102 = vmatpush1.bf16.msra.mxu0 0
    %103 = vmatprep.subr.bf16.mxu0 0
    %104 = vmatpush1.bf16.msra.mxu0 0
    %105 = vmatprep.subr.bf16.mxu0 0
    %106 = vmatpush1.bf16.msra.mxu0 0
    %107 = vmatprep.subr.bf16.mxu0 0
    %108 = vmatpush1.bf16.msra.mxu0 %v84
    %109 = vmatprep.subr.bf16.mxu0 0
    %110 = vmatpush2.bf16.msra.mxu0 0
    %111 = vmatprep.subr.bf16.mxu0 0
    %112 = vmatpush2.bf16.msra.mxu0 0
    %113 = vmatprep.subr.bf16.mxu0 0
    %114 = vmatpush2.bf16.msra.mxu0 0
    %115 = vmatprep.subr.bf16.mxu0 0
    %116 = vmatpush2.bf16.msra.mxu0 0
    %117 = vmatprep.subr.bf16.mxu0 0
    %118 = vmatpush2.bf16.msra.mxu0 0
    %119 = vmatprep.subr.bf16.mxu0 0
    %120 = vmatpush2.bf16.msra.mxu0 0
    %121 = vmatprep.subr.bf16.mxu0 0
    %122 = vmatpush2.bf16.msra.mxu0 0
    %123 = vmatprep.subr.bf16.mxu0 0
    %124 = vmatpush2.bf16.msra.mxu0 0
    %125 = vmatprep.mubr.bf16.mxu0 0
    %126 = vmatmul.mubr.bf16.gmra.mxu0 %v88
    %v127 = vpop.f32.mrf.mxu0
    %v128 = vadd.f32 %v53, %v127
    %v129 = vpop.f32.mrf.mxu0
    %v130 = vpop.f32.mrf.mxu0
    %v131 = vadd.f32 %v58, %v130
    %v132 = vpop.f32.mrf.mxu0
    %133 = vmatprep.mubr.bf16.mxu0 0
    %134 = vmatmul.mubr.bf16.gmra.mxu0 %v91
    %v135 = vpop.f32.mrf.mxu0
    %v136 = vadd.f32 %v63, %v135
    %v137 = vpop.f32.mrf.mxu0
    %v138 = vpop.f32.mrf.mxu0
    %v139 = vadd.f32 %v68, %v138
    %v140 = vpop.f32.mrf.mxu0
    %141 = vdwg.mxu0
    %v142 = vld [vmem:[%s3] sm:$0xf]
    %v143 = vld [vmem:[%s3 + $0x4] sm:$0xf]
    %v144 = vld [vmem:[%s3 + $0x8] sm:$0xf]
    %v145 = vld [vmem:[%s3 + $0xc] sm:$0xf]
    %v146 = vpack.c.bf16 %v131, %v128
    %v147 = vpack.c.bf16 %v139, %v136
    %v148 = vld [vmem:[%s4] sm:$0xff]
    %v149 = vld [vmem:[%s4 + $0x8] sm:$0xff]
    %v150 = vld [vmem:[%s4 + $0x10] sm:$0xff]
    %v151 = vld [vmem:[%s4 + $0x18] sm:$0xff]
    %153 = vset.pattern.permute.xlu0 0
    %154 = vperm.xlu0 %153, %v148
    %v155 = vpop.permute.xlu0 %154
    %158 = vset.pattern.permute.xlu0 0
    %159 = vperm.xlu0 %158, %v149
    %v160 = vpop.permute.xlu0 %159
    %163 = vset.pattern.permute.xlu0 0
    %164 = vperm.xlu0 %163, %v150
    %v165 = vpop.permute.xlu0 %164
    %168 = vset.pattern.permute.xlu0 0
    %169 = vperm.xlu0 %168, %v151
    %v170 = vpop.permute.xlu0 %169
    %v176 = vunpack.c.l.b16 %v142
    %v177 = vunpack.c.l.b16 %v143
    %v178 = vunpack.c.l.b16 %v144
    %v179 = vunpack.c.l.b16 %v145
    %v180 = vpack.c.b16 %v177, %v176
    %v181 = vpack.c.b16 %v179, %v178
    %vm182 = vcmask 261120
    %v184 = vsel %vm182, %v180, 0
    %v187 = vsel %vm182, %v181, 0
    %189 = vmatprep.subr.bf16.mxu0 0
    %190 = vmatpush1.bf16.msra.mxu0 0
    %191 = vmatprep.subr.bf16.mxu0 0
    %192 = vmatpush1.bf16.msra.mxu0 0
    %193 = vmatprep.subr.bf16.mxu0 0
    %194 = vmatpush1.bf16.msra.mxu0 0
    %195 = vmatprep.subr.bf16.mxu0 0
    %196 = vmatpush1.bf16.msra.mxu0 0
    %197 = vmatprep.subr.bf16.mxu0 0
    %198 = vmatpush1.bf16.msra.mxu0 0
    %199 = vmatprep.subr.bf16.mxu0 0
    %200 = vmatpush1.bf16.msra.mxu0 0
    %201 = vmatprep.subr.bf16.mxu0 0
    %202 = vmatpush1.bf16.msra.mxu0 %v147
    %203 = vmatprep.subr.bf16.mxu0 0
    %204 = vmatpush1.bf16.msra.mxu0 %v146
    %205 = vmatprep.subr.bf16.mxu0 0
    %206 = vmatpush2.bf16.msra.mxu0 0
    %207 = vmatprep.subr.bf16.mxu0 0
    %208 = vmatpush2.bf16.msra.mxu0 0
    %209 = vmatprep.subr.bf16.mxu0 0
    %210 = vmatpush2.bf16.msra.mxu0 0
    %211 = vmatprep.subr.bf16.mxu0 0
    %212 = vmatpush2.bf16.msra.mxu0 0
    %213 = vmatprep.subr.bf16.mxu0 0
    %214 = vmatpush2.bf16.msra.mxu0 0
    %215 = vmatprep.subr.bf16.mxu0 0
    %216 = vmatpush2.bf16.msra.mxu0 0
    %217 = vmatprep.subr.bf16.mxu0 0
    %218 = vmatpush2.bf16.msra.mxu0 0
    %219 = vmatprep.subr.bf16.mxu0 0
    %220 = vmatpush2.bf16.msra.mxu0 0
    %221 = vmatprep.mubr.bf16.mxu0 0
    %222 = vmatmul.mubr.bf16.gmra.mxu0 %v184
    %v223 = vpop.f32.mrf.mxu0
    %v224 = vadd.f32 %v155, %v223
    %v225 = vpop.f32.mrf.mxu0
    %v226 = vpop.f32.mrf.mxu0
    %v227 = vadd.f32 %v160, %v226
    %v228 = vpop.f32.mrf.mxu0
    %229 = vmatprep.mubr.bf16.mxu0 0
    %230 = vmatmul.mubr.bf16.gmra.mxu0 %v187
    %v231 = vpop.f32.mrf.mxu0
    %v232 = vadd.f32 %v165, %v231
    %v233 = vpop.f32.mrf.mxu0
    %v234 = vpop.f32.mrf.mxu0
    %v235 = vadd.f32 %v170, %v234
    %v236 = vpop.f32.mrf.mxu0
    %237 = vdwg.mxu0
    %v238 = vmax.f32 %v224, 0.0
    %v239 = vmax.f32 %v227, 0.0
    %v240 = vmax.f32 %v232, 0.0
    %v241 = vmax.f32 %v235, 0.0
    %v242 = vld [vmem:[%s5] sm:$0xf]
    %v243 = vld [vmem:[%s5 + $0x4] sm:$0xf]
    %v244 = vld [vmem:[%s5 + $0x8] sm:$0xf]
    %v245 = vld [vmem:[%s5 + $0xc] sm:$0xf]
    %v246 = vpack.c.bf16 %v239, %v238
    %v247 = vpack.c.bf16 %v241, %v240
    %v248 = vld [vmem:[%s6] sm:$0xff]
    %v249 = vld [vmem:[%s6 + $0x8] sm:$0xff]
    %v250 = vld [vmem:[%s6 + $0x10] sm:$0xff]
    %v251 = vld [vmem:[%s6 + $0x18] sm:$0xff]
    %253 = vset.pattern.permute.xlu0 0
    %254 = vperm.xlu0 %253, %v248
    %v255 = vpop.permute.xlu0 %254
    %258 = vset.pattern.permute.xlu0 0
    %259 = vperm.xlu0 %258, %v249
    %v260 = vpop.permute.xlu0 %259
    %263 = vset.pattern.permute.xlu0 0
    %264 = vperm.xlu0 %263, %v250
    %v265 = vpop.permute.xlu0 %264
    %268 = vset.pattern.permute.xlu0 0
    %269 = vperm.xlu0 %268, %v251
    %v270 = vpop.permute.xlu0 %269
    %v276 = vunpack.c.l.b16 %v242
    %v277 = vunpack.c.l.b16 %v243
    %v278 = vunpack.c.l.b16 %v244
    %v279 = vunpack.c.l.b16 %v245
    %v280 = vpack.c.b16 %v277, %v276
    %v281 = vpack.c.b16 %v279, %v278
    %v283 = vsel %vm182, %v280, 0
    %v286 = vsel %vm182, %v281, 0
    %288 = vmatprep.subr.bf16.mxu0 0
    %289 = vmatpush1.bf16.msra.mxu0 0
    %290 = vmatprep.subr.bf16.mxu0 0
    %291 = vmatpush1.bf16.msra.mxu0 0
    %292 = vmatprep.subr.bf16.mxu0 0
    %293 = vmatpush1.bf16.msra.mxu0 0
    %294 = vmatprep.subr.bf16.mxu0 0
    %295 = vmatpush1.bf16.msra.mxu0 0
    %296 = vmatprep.subr.bf16.mxu0 0
    %297 = vmatpush1.bf16.msra.mxu0 0
    %298 = vmatprep.subr.bf16.mxu0 0
    %299 = vmatpush1.bf16.msra.mxu0 0
    %300 = vmatprep.subr.bf16.mxu0 0
    %301 = vmatpush1.bf16.msra.mxu0 %v247
    %302 = vmatprep.subr.bf16.mxu0 0
    %303 = vmatpush1.bf16.msra.mxu0 %v246
    %304 = vmatprep.subr.bf16.mxu0 0
    %305 = vmatpush2.bf16.msra.mxu0 0
    %306 = vmatprep.subr.bf16.mxu0 0
    %307 = vmatpush2.bf16.msra.mxu0 0
    %308 = vmatprep.subr.bf16.mxu0 0
    %309 = vmatpush2.bf16.msra.mxu0 0
    %310 = vmatprep.subr.bf16.mxu0 0
    %311 = vmatpush2.bf16.msra.mxu0 0
    %312 = vmatprep.subr.bf16.mxu0 0
    %313 = vmatpush2.bf16.msra.mxu0 0
    %314 = vmatprep.subr.bf16.mxu0 0
    %315 = vmatpush2.bf16.msra.mxu0 0
    %316 = vmatprep.subr.bf16.mxu0 0
    %317 = vmatpush2.bf16.msra.mxu0 0
    %318 = vmatprep.subr.bf16.mxu0 0
    %319 = vmatpush2.bf16.msra.mxu0 0
    %320 = vmatprep.mubr.bf16.mxu0 0
    %321 = vmatmul.mubr.bf16.gmra.mxu0 %v283
    %v322 = vpop.f32.mrf.mxu0
    %v323 = vadd.f32 %v255, %v322
    %v324 = vpop.f32.mrf.mxu0
    %v325 = vpop.f32.mrf.mxu0
    %v326 = vadd.f32 %v260, %v325
    %v327 = vpop.f32.mrf.mxu0
    %328 = vmatprep.mubr.bf16.mxu0 0
    %329 = vmatmul.mubr.bf16.gmra.mxu0 %v286
    %v330 = vpop.f32.mrf.mxu0
    %v331 = vadd.f32 %v265, %v330
    %v332 = vpop.f32.mrf.mxu0
    %v333 = vpop.f32.mrf.mxu0
    %v334 = vadd.f32 %v270, %v333
    %v335 = vpop.f32.mrf.mxu0
    %336 = vdwg.mxu0
    %v337 = vmax.f32 %v323, 0.0
    %v338 = vmax.f32 %v326, 0.0
    %v339 = vmax.f32 %v331, 0.0
    %v340 = vmax.f32 %v334, 0.0
    %v341 = vld [vmem:[%s7] sm:$0xf]
    %v342 = vld [vmem:[%s7 + $0x4] sm:$0xf]
    %v343 = vld [vmem:[%s7 + $0x8] sm:$0xf]
    %v344 = vld [vmem:[%s7 + $0xc] sm:$0xf]
    %v345 = vpack.c.bf16 %v338, %v337
    %v346 = vpack.c.bf16 %v340, %v339
    %v347 = vld [vmem:[%s8] sm:$0xff]
    %v348 = vld [vmem:[%s8 + $0x8] sm:$0xff]
    %v349 = vld [vmem:[%s8 + $0x10] sm:$0xff]
    %v350 = vld [vmem:[%s8 + $0x18] sm:$0xff]
    %352 = vset.pattern.permute.xlu0 0
    %353 = vperm.xlu0 %352, %v347
    %v354 = vpop.permute.xlu0 %353
    %357 = vset.pattern.permute.xlu0 0
    %358 = vperm.xlu0 %357, %v348
    %v359 = vpop.permute.xlu0 %358
    %362 = vset.pattern.permute.xlu0 0
    %363 = vperm.xlu0 %362, %v349
    %v364 = vpop.permute.xlu0 %363
    %367 = vset.pattern.permute.xlu0 0
    %368 = vperm.xlu0 %367, %v350
    %v369 = vpop.permute.xlu0 %368
    %v375 = vunpack.c.l.b16 %v341
    %v376 = vunpack.c.l.b16 %v342
    %v377 = vunpack.c.l.b16 %v343
    %v378 = vunpack.c.l.b16 %v344
    %v379 = vpack.c.b16 %v376, %v375
    %v380 = vpack.c.b16 %v378, %v377
    %v382 = vsel %vm182, %v379, 0
    %v385 = vsel %vm182, %v380, 0
    %387 = vmatprep.subr.bf16.mxu0 0
    %388 = vmatpush1.bf16.msra.mxu0 0
    %389 = vmatprep.subr.bf16.mxu0 0
    %390 = vmatpush1.bf16.msra.mxu0 0
    %391 = vmatprep.subr.bf16.mxu0 0
    %392 = vmatpush1.bf16.msra.mxu0 0
    %393 = vmatprep.subr.bf16.mxu0 0
    %394 = vmatpush1.bf16.msra.mxu0 0
    %395 = vmatprep.subr.bf16.mxu0 0
    %396 = vmatpush1.bf16.msra.mxu0 0
    %397 = vmatprep.subr.bf16.mxu0 0
    %398 = vmatpush1.bf16.msra.mxu0 0
    %399 = vmatprep.subr.bf16.mxu0 0
    %400 = vmatpush1.bf16.msra.mxu0 %v346
    %401 = vmatprep.subr.bf16.mxu0 0
    %402 = vmatpush1.bf16.msra.mxu0 %v345
    %403 = vmatprep.subr.bf16.mxu0 0
    %404 = vmatpush2.bf16.msra.mxu0 0
    %405 = vmatprep.subr.bf16.mxu0 0
    %406 = vmatpush2.bf16.msra.mxu0 0
    %407 = vmatprep.subr.bf16.mxu0 0
    %408 = vmatpush2.bf16.msra.mxu0 0
    %409 = vmatprep.subr.bf16.mxu0 0
    %410 = vmatpush2.bf16.msra.mxu0 0
    %411 = vmatprep.subr.bf16.mxu0 0
    %412 = vmatpush2.bf16.msra.mxu0 0
    %413 = vmatprep.subr.bf16.mxu0 0
    %414 = vmatpush2.bf16.msra.mxu0 0
    %415 = vmatprep.subr.bf16.mxu0 0
    %416 = vmatpush2.bf16.msra.mxu0 0
    %417 = vmatprep.subr.bf16.mxu0 0
    %418 = vmatpush2.bf16.msra.mxu0 0
    %419 = vmatprep.mubr.bf16.mxu0 0
    %420 = vmatmul.mubr.bf16.gmra.mxu0 %v382
    %v421 = vpop.f32.mrf.mxu0
    %v422 = vadd.f32 %v354, %v421
    %v423 = vpop.f32.mrf.mxu0
    %v424 = vpop.f32.mrf.mxu0
    %v425 = vadd.f32 %v359, %v424
    %v426 = vpop.f32.mrf.mxu0
    %427 = vmatprep.mubr.bf16.mxu0 0
    %428 = vmatmul.mubr.bf16.gmra.mxu0 %v385
    %v429 = vpop.f32.mrf.mxu0
    %v430 = vadd.f32 %v364, %v429
    %v431 = vpop.f32.mrf.mxu0
    %v432 = vpop.f32.mrf.mxu0
    %v433 = vadd.f32 %v369, %v432
    %v434 = vpop.f32.mrf.mxu0
    %435 = vdwg.mxu0
    %v436 = vmax.f32 %v422, 0.0
    %v437 = vmax.f32 %v425, 0.0
    %v438 = vmax.f32 %v430, 0.0
    %v439 = vmax.f32 %v433, 0.0
    %v440 = vld [vmem:[%s9] sm:$0xf]
    %v441 = vpack.c.bf16 %v437, %v436
    %v442 = vpack.c.bf16 %v439, %v438
    %v443 = vld [vmem:[%s10] sm:$0xff]
    %445 = vset.pattern.permute.xlu0 0
    %446 = vperm.xlu0 %445, %v443
    %v447 = vpop.permute.xlu0 %446
    %v450 = vsel %vm182, %v440, 0
    %452 = vmatprep.subr.bf16.mxu0 0
    %453 = vmatpush1.bf16.msra.mxu0 0
    %454 = vmatprep.subr.bf16.mxu0 0
    %455 = vmatpush1.bf16.msra.mxu0 0
    %456 = vmatprep.subr.bf16.mxu0 0
    %457 = vmatpush1.bf16.msra.mxu0 0
    %458 = vmatprep.subr.bf16.mxu0 0
    %459 = vmatpush1.bf16.msra.mxu0 0
    %460 = vmatprep.subr.bf16.mxu0 0
    %461 = vmatpush1.bf16.msra.mxu0 0
    %462 = vmatprep.subr.bf16.mxu0 0
    %463 = vmatpush1.bf16.msra.mxu0 0
    %464 = vmatprep.subr.bf16.mxu0 0
    %465 = vmatpush1.bf16.msra.mxu0 %v442
    %466 = vmatprep.subr.bf16.mxu0 0
    %467 = vmatpush1.bf16.msra.mxu0 %v441
    %468 = vmatprep.subr.bf16.mxu0 0
    %469 = vmatpush2.bf16.msra.mxu0 0
    %470 = vmatprep.subr.bf16.mxu0 0
    %471 = vmatpush2.bf16.msra.mxu0 0
    %472 = vmatprep.subr.bf16.mxu0 0
    %473 = vmatpush2.bf16.msra.mxu0 0
    %474 = vmatprep.subr.bf16.mxu0 0
    %475 = vmatpush2.bf16.msra.mxu0 0
    %476 = vmatprep.subr.bf16.mxu0 0
    %477 = vmatpush2.bf16.msra.mxu0 0
    %478 = vmatprep.subr.bf16.mxu0 0
    %479 = vmatpush2.bf16.msra.mxu0 0
    %480 = vmatprep.subr.bf16.mxu0 0
    %481 = vmatpush2.bf16.msra.mxu0 0
    %482 = vmatprep.subr.bf16.mxu0 0
    %483 = vmatpush2.bf16.msra.mxu0 0
    %484 = vmatprep.mubr.bf16.mxu0 0
    %485 = vmatmul.mubr.bf16.gmra.mxu0 %v450
    %v486 = vpop.f32.mrf.mxu0
    %v487 = vadd.f32 %v447, %v486
    %v488 = vpop.f32.mrf.mxu0
    %v489 = vpop.f32.mrf.mxu0
    %v490 = vpop.f32.mrf.mxu0
    %491 = vdwg.mxu0
    %492 = vst [vmem:[#allocation2] sm:$0xff] %v487
    // Predicated region
    $region46: #{tpu_custom_call.1} parent=1 // pred_check
      _
    $region47: #{tpu_custom_call.1} parent=1 // pred_check_branch
      %494 = sbr.rel (0) target = $region49
    $region48: #{tpu_custom_call.1} parent=1 // pred_region
      %s496 = ssub.s32 128, 128
      %497 = vsyncadd [#allocation3], %s496
      %s499 = sshll.u32 [#allocation2], 4
      %s500 = int_to_ptr.vmem [resolvable:$true] %s499
      %502 = dma.vmem_to_hbm [thread:$0]  %s500, 128, %s11, [#allocation3]
    $region49: #{tpu_custom_call.1} parent=1 // pred_fallthru
      _
    // Predicated region
    $region50: #{tpu_custom_call.1} parent=1 // pred_check
      _
    $region51: #{tpu_custom_call.1} parent=1 // pred_check_branch
      %504 = sbr.rel (0) target = $region53
    $region52: #{tpu_custom_call.1} parent=1 // pred_region
      %505 = dma.done [#allocation3], 128
    $region53: #{tpu_custom_call.1} parent=1 // pred_fallthru
      _
    %506 = vsyncpa [#allocation3], 1

</llo_original>
